<compile_context>
chip_gen: v7x
topology: tpu7x:2x2x1
jax: 0.10.0
libtpu: 0.0.40
codegen_flags: <defaults>
</compile_context>

<pallas_src>
import functools

import jax
import jax.numpy as jnp
from jax.experimental import pallas as pl
from jax.experimental.pallas import tpu as pltpu

LANE = 128
SUBLANE = 16        # bf16 LHS packs rows in pairs; keep row counts %16 == 0
MAX_ROW_TILE = 512  # conservative tile: fits v5e/v6e/v7x scoped VMEM easily


# ----------------------------------------------------------------------------
# Kernel: full MLP forward (outer-product first layer + bf16 matmul chain).
# Runs once per row tile; weight/bias refs are VMEM-resident across steps.
# ----------------------------------------------------------------------------
def mlp_kernel(x_ref, w0_ref, wh_ref, wl_ref, b_ref, out_ref):
    n_hidden = wh_ref.shape[0]          # number of (N,N) hidden layers
    n_neurons = wh_ref.shape[1]         # N
    out_pad = wl_ref.shape[1]           # lane-padded output width

    x = x_ref[...]                      # (tile, 2) f32
    w0 = w0_ref[...]                    # (2, N)    f32 (VPU path, no cast)
    b = b_ref[...]                      # (L+2, Bw) f32

    # Layer 0: K=2 -> VPU outer product instead of a <2%-utilized MXU matmul.
    h = (x[:, 0:1] * w0[0:1, :]
         + x[:, 1:2] * w0[1:2, :]
         + b[0:1, :n_neurons])
    h = jnp.maximum(h, 0.0)

    # Hidden layers: bf16 matmuls on the MXU, f32 accumulation.
    # (Keep the bias add / ReLU tail in f32: v5e has no bf16 VALU.)
    for i in range(n_hidden):
        h = jnp.dot(h.astype(jnp.bfloat16), wh_ref[i],
                    preferred_element_type=jnp.float32)
        h = jnp.maximum(h + b[i + 1:i + 2, :n_neurons], 0.0)

    # Final layer (no activation), lane-dense zero-padded output slab.
    h = jnp.dot(h.astype(jnp.bfloat16), wl_ref[...],
                preferred_element_type=jnp.float32)
    out_ref[...] = (h + b[n_hidden + 1:n_hidden + 2, :out_pad]).astype(out_ref.dtype)


# ----------------------------------------------------------------------------
# Parameter init (mimics nn.Linear's U(-1/sqrt(fan_in), +1/sqrt(fan_in))).
# Weights stored (in_features, out_features) so the kernel computes h @ W + b
# (identical to PyTorch's x @ W.T + b with its (out,in) storage).
# ----------------------------------------------------------------------------
def init_params(key, num_features, num_teams, num_neurons=128, num_layers=5):
    dims = [num_features] + [num_neurons] * (num_layers + 1) + [num_teams]
    params = []
    for i in range(len(dims) - 1):
        fan_in, fan_out = dims[i], dims[i + 1]
        key, kw, kb = jax.random.split(key, 3)
        bound = 1.0 / jnp.sqrt(jnp.float32(fan_in))
        w = jax.random.uniform(kw, (fan_in, fan_out), jnp.float32, -bound, bound)
        b = jax.random.uniform(kb, (fan_out,), jnp.float32, -bound, bound)
        params.append((w, b))
    return params


def pack_params(params, num_neurons, num_teams):
    """Collapse per-layer params into 4 slabs.  Call ONCE at init time.

    w0 stays f32 (VPU outer product), hidden/last weights are bf16 (MXU),
    biases are one f32 slab.  Invariant: bias_w = max(num_neurons, out_pad)
    so both the hidden-layer and final-layer bias slices are in range.
    """
    out_pad = pl.cdiv(num_teams, LANE) * LANE
    bias_w = max(num_neurons, out_pad)

    w0 = params[0][0].astype(jnp.float32)                                # (2, N)
    wh = jnp.stack([w for (w, _) in params[1:-1]]).astype(jnp.bfloat16)  # (L, N, N)
    wl = jnp.zeros((num_neurons, out_pad), jnp.float32)
    wl = wl.at[:, :num_teams].set(params[-1][0]).astype(jnp.bfloat16)    # (N, out_pad)

    b_rows = [jnp.pad(bvec, (0, bias_w - bvec.shape[0])) for (_, bvec) in params]
    b_all = jnp.stack(b_rows).astype(jnp.float32)                        # (L+2, bias_w)
    return w0, wh, wl, b_all


# ----------------------------------------------------------------------------
# Wrapper: reshape / row padding + row-gridded pallas_call.
# ----------------------------------------------------------------------------
@functools.partial(jax.jit, static_argnums=(2,))
def hw2model_forward(x, packed, num_teams):
    w0, wh, wl, b_all = packed
    n_hidden, n_neurons = wh.shape[0], wh.shape[1]
    out_pad = wl.shape[1]

    x2 = jnp.reshape(x, (-1, 2)).astype(jnp.float32)   # PyTorch: x.view(-1, 2)
    rows = x2.shape[0]

    # Row tiling: sublane(16)-align the tile, pad rows so the grid divides.
    tile = min(MAX_ROW_TILE, pl.cdiv(rows, SUBLANE) * SUBLANE)
    rows_pad = pl.cdiv(rows, tile) * tile
    if rows_pad != rows:
        x2 = jnp.pad(x2, ((0, rows_pad - rows), (0, 0)))
    grid = (rows_pad // tile,)

    flops = rows_pad * (4 * n_neurons
                        + n_hidden * 2 * n_neurons * n_neurons
                        + 2 * n_neurons * out_pad)
    bytes_accessed = (x2.size * 4 + w0.size * 4 + wh.size * 2 + wl.size * 2
                      + b_all.size * 4 + rows_pad * out_pad * 4)

    def const_spec(shape):
        # Whole-array block, same block every grid step -> fetched once,
        # stays VMEM-resident across the row grid.
        return pl.BlockSpec(shape, lambda i: (0,) * len(shape))

    out_padded = pl.pallas_call(
        mlp_kernel,
        out_shape=jax.ShapeDtypeStruct((rows_pad, out_pad), jnp.float32),
        grid=grid,
        in_specs=[
            pl.BlockSpec((tile, 2), lambda i: (i, 0)),       # x rows
            const_spec(w0.shape),                            # (2, N)      f32
            const_spec(wh.shape),                            # (L, N, N)   bf16
            const_spec(wl.shape),                            # (N, out_pad) bf16
            const_spec(b_all.shape),                         # (L+2, Bw)   f32
        ],
        out_specs=pl.BlockSpec((tile, out_pad), lambda i: (i, 0)),
        compiler_params=pltpu.CompilerParams(
            dimension_semantics=("parallel",)),               # megacore on v7x
        cost_estimate=pl.CostEstimate(
            flops=flops, transcendentals=0, bytes_accessed=bytes_accessed),
    )(x2, w0, wh, wl, b_all)

    return out_padded[:rows, :num_teams]


# ----------------------------------------------------------------------------
# Pure-JAX reference (same bf16-rounded weights, f32 math) for sanity check.
# ----------------------------------------------------------------------------
def hw2model_ref(x, params):
    h = jnp.reshape(x, (-1, 2)).astype(jnp.float32)
    for i, (w, b) in enumerate(params):
        wf = w.astype(jnp.bfloat16).astype(jnp.float32)
        h = h @ wf + b
        if i < len(params) - 1:
            h = jnp.maximum(h, 0.0)
    return h


if __name__ == "__main__":
    key = jax.random.PRNGKey(0)
    k_x, k_p = jax.random.split(key)

    # num_features=2 is forced by x.view(-1, 2); keep neurons lane-aligned.
    NUM_FEATURES, NUM_TEAMS, NUM_NEURONS, NUM_LAYERS = 2, 32, 128, 5

    # Example input: (16, 8) -> view(-1, 2) gives 64 rows of 2 features.
    x = jax.random.normal(k_x, (16, 8), jnp.float32)
    params = init_params(k_p, NUM_FEATURES, NUM_TEAMS, NUM_NEURONS, NUM_LAYERS)

    # Pack weights ONCE (not per forward call).
    packed = jax.tree_util.tree_map(
        jax.block_until_ready, pack_params(params, NUM_NEURONS, NUM_TEAMS))

    out = jax.block_until_ready(hw2model_forward(x, packed, NUM_TEAMS))
    ref = hw2model_ref(x, params)

    assert out.shape == (64, NUM_TEAMS), out.shape
    # bf16 activations/weights in the kernel vs f32 reference -> loose tolerance
    # (accepted precision contract of this kernel).
    assert jnp.allclose(out, ref, atol=5e-2, rtol=5e-2), "mismatch vs reference"

    print("KERNEL_OK")
</pallas_src>

<mosaic_0001>
module attributes {stable_mosaic.version = 11 : i64} {
  func.func @mlp_kernel(%arg0: i32, %arg1: memref<64x2xf32, #tpu.memory_space<vmem>>, %arg2: memref<2x128xf32, #tpu.memory_space<vmem>>, %arg3: memref<5x128x128xbf16, #tpu.memory_space<vmem>>, %arg4: memref<128x128xbf16, #tpu.memory_space<vmem>>, %arg5: memref<7x128xf32, #tpu.memory_space<vmem>>, %arg6: memref<64x128xf32, #tpu.memory_space<vmem>>) attributes {dimension_semantics = [#tpu.dimension_semantics<parallel>], iteration_bounds = array<i64: 1>, scalar_prefetch = 0 : i64, scratch_operands = 0 : i64, tpu.core_type = #tpu.core_type<tc>, window_params = [{transform_indices = @transform_0, window_bounds = array<i64: 64, 2>}, {pipeline_mode = #tpu.pipeline_mode<synchronous>, transform_indices = @transform_1, window_bounds = array<i64: 2, 128>}, {pipeline_mode = #tpu.pipeline_mode<synchronous>, transform_indices = @transform_2, window_bounds = array<i64: 5, 128, 128>}, {pipeline_mode = #tpu.pipeline_mode<synchronous>, transform_indices = @transform_3, window_bounds = array<i64: 128, 128>}, {pipeline_mode = #tpu.pipeline_mode<synchronous>, transform_indices = @transform_4, window_bounds = array<i64: 7, 128>}, {transform_indices = @transform_5, window_bounds = array<i64: 64, 128>}]} {
    %c0 = arith.constant 0 : index
    %c0_0 = arith.constant 0 : index
    %0 = vector.load %arg1[%c0, %c0_0] : memref<64x2xf32, #tpu.memory_space<vmem>>, vector<64x2xf32>
    %c0_1 = arith.constant 0 : index
    %c0_2 = arith.constant 0 : index
    %1 = vector.load %arg2[%c0_1, %c0_2] : memref<2x128xf32, #tpu.memory_space<vmem>>, vector<2x128xf32>
    %c0_3 = arith.constant 0 : index
    %c0_4 = arith.constant 0 : index
    %2 = vector.load %arg5[%c0_3, %c0_4] : memref<7x128xf32, #tpu.memory_space<vmem>>, vector<7x128xf32>
    %3 = vector.extract_strided_slice %0 {offsets = [0, 0], sizes = [64, 1], strides = [1, 1]} : vector<64x2xf32> to vector<64x1xf32>
    %4 = vector.extract_strided_slice %1 {offsets = [0, 0], sizes = [1, 128], strides = [1, 1]} : vector<2x128xf32> to vector<1x128xf32>
    %5 = vector.broadcast %3 : vector<64x1xf32> to vector<64x128xf32>
    %6 = vector.broadcast %4 : vector<1x128xf32> to vector<64x128xf32>
    %7 = arith.mulf %5, %6 : vector<64x128xf32>
    %8 = vector.extract_strided_slice %0 {offsets = [0, 1], sizes = [64, 1], strides = [1, 1]} : vector<64x2xf32> to vector<64x1xf32>
    %9 = vector.extract_strided_slice %1 {offsets = [1, 0], sizes = [1, 128], strides = [1, 1]} : vector<2x128xf32> to vector<1x128xf32>
    %10 = vector.broadcast %8 : vector<64x1xf32> to vector<64x128xf32>
    %11 = vector.broadcast %9 : vector<1x128xf32> to vector<64x128xf32>
    %12 = arith.mulf %10, %11 : vector<64x128xf32>
    %13 = arith.addf %7, %12 : vector<64x128xf32>
    %14 = vector.extract_strided_slice %2 {offsets = [0, 0], sizes = [1, 128], strides = [1, 1]} : vector<7x128xf32> to vector<1x128xf32>
    %15 = vector.broadcast %14 : vector<1x128xf32> to vector<64x128xf32>
    %16 = arith.addf %13, %15 : vector<64x128xf32>
    %cst = arith.constant 0.000000e+00 : f32
    %17 = vector.broadcast %cst : f32 to vector<64x128xf32>
    %18 = arith.maximumf %16, %17 : vector<64x128xf32>
    %19 = arith.truncf %18 : vector<64x128xf32> to vector<64x128xbf16>
    %c0_5 = arith.constant 0 : index
    %c0_6 = arith.constant 0 : index
    %c0_7 = arith.constant 0 : index
    %20 = vector.load %arg3[%c0_5, %c0_6, %c0_7] : memref<5x128x128xbf16, #tpu.memory_space<vmem>>, vector<1x128x128xbf16>
    %21 = vector.shape_cast %20 : vector<1x128x128xbf16> to vector<128x128xbf16>
    %cst_8 = arith.constant dense<0.000000e+00> : vector<64x128xf32>
    %22 = tpu.matmul %19, %21, %cst_8 {dimension_numbers = #tpu.dot_dimension_numbers<[1], [0], [0], [1], [0, 0, 1, 1], [], []>} : vector<64x128xbf16>, vector<128x128xbf16>, vector<64x128xf32> -> vector<64x128xf32>
    %23 = vector.extract_strided_slice %2 {offsets = [1, 0], sizes = [1, 128], strides = [1, 1]} : vector<7x128xf32> to vector<1x128xf32>
    %24 = vector.broadcast %23 : vector<1x128xf32> to vector<64x128xf32>
    %25 = arith.addf %22, %24 : vector<64x128xf32>
    %cst_9 = arith.constant 0.000000e+00 : f32
    %26 = vector.broadcast %cst_9 : f32 to vector<64x128xf32>
    %27 = arith.maximumf %25, %26 : vector<64x128xf32>
    %28 = arith.truncf %27 : vector<64x128xf32> to vector<64x128xbf16>
    %c1 = arith.constant 1 : index
    %c0_10 = arith.constant 0 : index
    %c0_11 = arith.constant 0 : index
    %29 = vector.load %arg3[%c1, %c0_10, %c0_11] : memref<5x128x128xbf16, #tpu.memory_space<vmem>>, vector<1x128x128xbf16>
    %30 = vector.shape_cast %29 : vector<1x128x128xbf16> to vector<128x128xbf16>
    %cst_12 = arith.constant dense<0.000000e+00> : vector<64x128xf32>
    %31 = tpu.matmul %28, %30, %cst_12 {dimension_numbers = #tpu.dot_dimension_numbers<[1], [0], [0], [1], [0, 0, 1, 1], [], []>} : vector<64x128xbf16>, vector<128x128xbf16>, vector<64x128xf32> -> vector<64x128xf32>
    %32 = vector.extract_strided_slice %2 {offsets = [2, 0], sizes = [1, 128], strides = [1, 1]} : vector<7x128xf32> to vector<1x128xf32>
    %33 = vector.broadcast %32 : vector<1x128xf32> to vector<64x128xf32>
    %34 = arith.addf %31, %33 : vector<64x128xf32>
    %cst_13 = arith.constant 0.000000e+00 : f32
    %35 = vector.broadcast %cst_13 : f32 to vector<64x128xf32>
    %36 = arith.maximumf %34, %35 : vector<64x128xf32>
    %37 = arith.truncf %36 : vector<64x128xf32> to vector<64x128xbf16>
    %c2 = arith.constant 2 : index
    %c0_14 = arith.constant 0 : index
    %c0_15 = arith.constant 0 : index
    %38 = vector.load %arg3[%c2, %c0_14, %c0_15] : memref<5x128x128xbf16, #tpu.memory_space<vmem>>, vector<1x128x128xbf16>
    %39 = vector.shape_cast %38 : vector<1x128x128xbf16> to vector<128x128xbf16>
    %cst_16 = arith.constant dense<0.000000e+00> : vector<64x128xf32>
    %40 = tpu.matmul %37, %39, %cst_16 {dimension_numbers = #tpu.dot_dimension_numbers<[1], [0], [0], [1], [0, 0, 1, 1], [], []>} : vector<64x128xbf16>, vector<128x128xbf16>, vector<64x128xf32> -> vector<64x128xf32>
    %41 = vector.extract_strided_slice %2 {offsets = [3, 0], sizes = [1, 128], strides = [1, 1]} : vector<7x128xf32> to vector<1x128xf32>
    %42 = vector.broadcast %41 : vector<1x128xf32> to vector<64x128xf32>
    %43 = arith.addf %40, %42 : vector<64x128xf32>
    %cst_17 = arith.constant 0.000000e+00 : f32
    %44 = vector.broadcast %cst_17 : f32 to vector<64x128xf32>
    %45 = arith.maximumf %43, %44 : vector<64x128xf32>
    %46 = arith.truncf %45 : vector<64x128xf32> to vector<64x128xbf16>
    %c3 = arith.constant 3 : index
    %c0_18 = arith.constant 0 : index
    %c0_19 = arith.constant 0 : index
    %47 = vector.load %arg3[%c3, %c0_18, %c0_19] : memref<5x128x128xbf16, #tpu.memory_space<vmem>>, vector<1x128x128xbf16>
    %48 = vector.shape_cast %47 : vector<1x128x128xbf16> to vector<128x128xbf16>
    %cst_20 = arith.constant dense<0.000000e+00> : vector<64x128xf32>
    %49 = tpu.matmul %46, %48, %cst_20 {dimension_numbers = #tpu.dot_dimension_numbers<[1], [0], [0], [1], [0, 0, 1, 1], [], []>} : vector<64x128xbf16>, vector<128x128xbf16>, vector<64x128xf32> -> vector<64x128xf32>
    %50 = vector.extract_strided_slice %2 {offsets = [4, 0], sizes = [1, 128], strides = [1, 1]} : vector<7x128xf32> to vector<1x128xf32>
    %51 = vector.broadcast %50 : vector<1x128xf32> to vector<64x128xf32>
    %52 = arith.addf %49, %51 : vector<64x128xf32>
    %cst_21 = arith.constant 0.000000e+00 : f32
    %53 = vector.broadcast %cst_21 : f32 to vector<64x128xf32>
    %54 = arith.maximumf %52, %53 : vector<64x128xf32>
    %55 = arith.truncf %54 : vector<64x128xf32> to vector<64x128xbf16>
    %c4 = arith.constant 4 : index
    %c0_22 = arith.constant 0 : index
    %c0_23 = arith.constant 0 : index
    %56 = vector.load %arg3[%c4, %c0_22, %c0_23] : memref<5x128x128xbf16, #tpu.memory_space<vmem>>, vector<1x128x128xbf16>
    %57 = vector.shape_cast %56 : vector<1x128x128xbf16> to vector<128x128xbf16>
    %cst_24 = arith.constant dense<0.000000e+00> : vector<64x128xf32>
    %58 = tpu.matmul %55, %57, %cst_24 {dimension_numbers = #tpu.dot_dimension_numbers<[1], [0], [0], [1], [0, 0, 1, 1], [], []>} : vector<64x128xbf16>, vector<128x128xbf16>, vector<64x128xf32> -> vector<64x128xf32>
    %59 = vector.extract_strided_slice %2 {offsets = [5, 0], sizes = [1, 128], strides = [1, 1]} : vector<7x128xf32> to vector<1x128xf32>
    %60 = vector.broadcast %59 : vector<1x128xf32> to vector<64x128xf32>
    %61 = arith.addf %58, %60 : vector<64x128xf32>
    %cst_25 = arith.constant 0.000000e+00 : f32
    %62 = vector.broadcast %cst_25 : f32 to vector<64x128xf32>
    %63 = arith.maximumf %61, %62 : vector<64x128xf32>
    %64 = arith.truncf %63 : vector<64x128xf32> to vector<64x128xbf16>
    %c0_26 = arith.constant 0 : index
    %c0_27 = arith.constant 0 : index
    %65 = vector.load %arg4[%c0_26, %c0_27] : memref<128x128xbf16, #tpu.memory_space<vmem>>, vector<128x128xbf16>
    %cst_28 = arith.constant dense<0.000000e+00> : vector<64x128xf32>
    %66 = tpu.matmul %64, %65, %cst_28 {dimension_numbers = #tpu.dot_dimension_numbers<[1], [0], [0], [1], [0, 0, 1, 1], [], []>} : vector<64x128xbf16>, vector<128x128xbf16>, vector<64x128xf32> -> vector<64x128xf32>
    %67 = vector.extract_strided_slice %2 {offsets = [6, 0], sizes = [1, 128], strides = [1, 1]} : vector<7x128xf32> to vector<1x128xf32>
    %68 = vector.broadcast %67 : vector<1x128xf32> to vector<64x128xf32>
    %69 = arith.addf %66, %68 : vector<64x128xf32>
    %c0_29 = arith.constant 0 : index
    %c0_30 = arith.constant 0 : index
    %70 = vector.load %arg6[%c0_29, %c0_30] : memref<64x128xf32, #tpu.memory_space<vmem>>, vector<64x128xf32>
    tpu.vector_store %arg6[%c0_29, %c0_30], %69 {strides = array<i32>} : memref<64x128xf32, #tpu.memory_space<vmem>>, vector<64x128xf32>,
    return
  }
  func.func @transform_0(%arg0: i32) -> (i32, i32) {
    %c0_i32 = arith.constant 0 : i32
    %c0_i32_0 = arith.constant 0 : i32
    return %arg0, %c0_i32 : i32, i32
  }
  func.func @transform_1(%arg0: i32) -> (i32, i32) {
    %c0_i32 = arith.constant 0 : i32
    %c0_i32_0 = arith.constant 0 : i32
    %c0_i32_1 = arith.constant 0 : i32
    return %c0_i32, %c0_i32_0 : i32, i32
  }
  func.func @transform_2(%arg0: i32) -> (i32, i32, i32) {
    %c0_i32 = arith.constant 0 : i32
    %c0_i32_0 = arith.constant 0 : i32
    %c0_i32_1 = arith.constant 0 : i32
    %c0_i32_2 = arith.constant 0 : i32
    return %c0_i32, %c0_i32_0, %c0_i32_1 : i32, i32, i32
  }
  func.func @transform_3(%arg0: i32) -> (i32, i32) {
    %c0_i32 = arith.constant 0 : i32
    %c0_i32_0 = arith.constant 0 : i32
    %c0_i32_1 = arith.constant 0 : i32
    return %c0_i32, %c0_i32_0 : i32, i32
  }
  func.func @transform_4(%arg0: i32) -> (i32, i32) {
    %c0_i32 = arith.constant 0 : i32
    %c0_i32_0 = arith.constant 0 : i32
    %c0_i32_1 = arith.constant 0 : i32
    return %c0_i32, %c0_i32_0 : i32, i32
  }
  func.func @transform_5(%arg0: i32) -> (i32, i32) {
    %c0_i32 = arith.constant 0 : i32
    %c0_i32_0 = arith.constant 0 : i32
    return %arg0, %c0_i32 : i32, i32
  }
}

</mosaic_0001>

<llo_original>
// kernel: hw2model_forward.1
$region0: #{hw2model_forward.1}
  #allocation0 [shape = 'u32[]', space=smem, size = 0x4, offset = 0x4, fixed_abs, tag = 'smem constant byte address 0x4 - core index']
  #allocation1 [shape = 'u32[144,128]{1,0:T(1,128)}', space=vmem, size = 0x12000, scoped, tag = 'internal scratch']
  %s0 = inlined_call_operand.vmem [shape: f32[64,2], index: 0, kind: input, shape index: {}]
  %s1 = inlined_call_operand.vmem [shape: f32[2,128], index: 1, kind: input, shape index: {}]
  %s2 = inlined_call_operand.hbm [shape: bf16[5,128,128], index: 2, kind: input, shape index: {}]
  %s3 = inlined_call_operand.vmem [shape: bf16[128,128], index: 3, kind: input, shape index: {}]
  %s4 = inlined_call_operand.vmem [shape: f32[7,128], index: 4, kind: input, shape index: {}]
  %s5 = inlined_call_operand.vmem [shape: f32[64,128], index: 5, kind: output, shape index: {}]
  %s6 = sld [smem:[#allocation0]]
  $region34: #{hw2model_forward.1} parent=0
    _
  %s8 = ssub.s32 1, %s6
  %s9 = scalar_select 0, %s8, %s6
  $region1: #{hw2model_forward.1} parent=0
    #allocation2 [shape = 'u8[163840]{0}', space=vmem, size = 0x28000, scoped, tag = 'input window, operand 2, single buffered']
    #allocation3 [shape = 's32[1]{0}', space=sflag, size = 0x4, scoped, tag = 'scoped memory for hw2model_forward.1']
    %10 = vsyncpa [#allocation3], 0
    // Predicated region
    $region2: #{hw2model_forward.1} parent=1 // pred_check
      _
    $region3: #{hw2model_forward.1} parent=1 // pred_check_branch
      %12 = sbr.rel (0) target = $region5
    $region4: #{hw2model_forward.1} parent=1 // pred_region
      _
    $region5: #{hw2model_forward.1} parent=1 // pred_fallthru
      _
    // Predicated region
    $region6: #{hw2model_forward.1} parent=1 // pred_check
      _
    $region7: #{hw2model_forward.1} parent=1 // pred_check_branch
      %14 = sbr.rel (0) target = $region9
    $region8: #{hw2model_forward.1} parent=1 // pred_region
      _
    $region9: #{hw2model_forward.1} parent=1 // pred_fallthru
      _
    // Predicated region
    $region10: #{hw2model_forward.1} parent=1 // pred_check
      _
    $region11: #{hw2model_forward.1} parent=1 // pred_check_branch
      %16 = sbr.rel (0) target = $region13
    $region12: #{hw2model_forward.1} parent=1 // pred_region
      %s18 = ssub.s32 5120, 5120
      %19 = vsyncadd [#allocation3], %s18
      %s20 = sshll.u32 [#allocation2], 4
      %s21 = int_to_ptr.vmem [resolvable:$true] %s20
      %26 = dma.hbm_to_vmem [thread:$0]  %s2, 5120, %s21, [#allocation3], 64, 64, 4
    $region13: #{hw2model_forward.1} parent=1 // pred_fallthru
      _
    // Predicated region
    $region14: #{hw2model_forward.1} parent=1 // pred_check
      _
    $region15: #{hw2model_forward.1} parent=1 // pred_check_branch
      %28 = sbr.rel (0) target = $region17
    $region16: #{hw2model_forward.1} parent=1 // pred_region
      _
    $region17: #{hw2model_forward.1} parent=1 // pred_fallthru
      _
    // Predicated region
    $region18: #{hw2model_forward.1} parent=1 // pred_check
      _
    $region19: #{hw2model_forward.1} parent=1 // pred_check_branch
      %30 = sbr.rel (0) target = $region21
    $region20: #{hw2model_forward.1} parent=1 // pred_region
      _
    $region21: #{hw2model_forward.1} parent=1 // pred_fallthru
      _
    // Predicated region
    $region22: #{hw2model_forward.1} parent=1 // pred_check
      _
    $region23: #{hw2model_forward.1} parent=1 // pred_check_branch
      %32 = sbr.rel (0) target = $region25
    $region24: #{hw2model_forward.1} parent=1 // pred_region
      %33 = dma.done [#allocation3], 5120
    $region25: #{hw2model_forward.1} parent=1 // pred_fallthru
      _
    %v35 = vld [vmem:[%s0] sm:$0xff]
    %v36 = vld [vmem:[%s0 + $0x8] sm:$0xff]
    %v37 = vld [vmem:[%s0 + $0x10] sm:$0xff]
    %v38 = vld [vmem:[%s0 + $0x18] sm:$0xff]
    %v39 = vld [vmem:[%s0 + $0x20] sm:$0xff]
    %v40 = vld [vmem:[%s0 + $0x28] sm:$0xff]
    %v41 = vld [vmem:[%s0 + $0x30] sm:$0xff]
    %v42 = vld [vmem:[%s0 + $0x38] sm:$0xff]
    %v43 = vld [vmem:[%s1] sm:$0x3]
    %v44 = vld [vmem:[%s4] sm:$0x7f]
    %46 = vset.pattern.permute.xlu0 0
    %47 = vperm.xlu0 %46, %v35
    %v48 = vpop.permute.xlu0 %47
    %51 = vset.pattern.permute.xlu0 0
    %52 = vperm.xlu0 %51, %v36
    %v53 = vpop.permute.xlu0 %52
    %56 = vset.pattern.permute.xlu0 0
    %57 = vperm.xlu0 %56, %v37
    %v58 = vpop.permute.xlu0 %57
    %61 = vset.pattern.permute.xlu0 0
    %62 = vperm.xlu0 %61, %v38
    %v63 = vpop.permute.xlu0 %62
    %66 = vset.pattern.permute.xlu0 0
    %67 = vperm.xlu0 %66, %v39
    %v68 = vpop.permute.xlu0 %67
    %71 = vset.pattern.permute.xlu0 0
    %72 = vperm.xlu0 %71, %v40
    %v73 = vpop.permute.xlu0 %72
    %76 = vset.pattern.permute.xlu0 0
    %77 = vperm.xlu0 %76, %v41
    %v78 = vpop.permute.xlu0 %77
    %81 = vset.pattern.permute.xlu0 0
    %82 = vperm.xlu0 %81, %v42
    %v83 = vpop.permute.xlu0 %82
    %v85 = vlaneseq
    %v86 = vshrl.u32 %v85, 7
    %v87 = vsub.s32 0, %v86
    %v88 = vrot.slane %v43, %v87
    %v89 = vmul.f32 %v48, %v88
    %v90 = vmul.f32 %v53, %v88
    %v91 = vmul.f32 %v58, %v88
    %v92 = vmul.f32 %v63, %v88
    %v93 = vmul.f32 %v68, %v88
    %v94 = vmul.f32 %v73, %v88
    %v95 = vmul.f32 %v78, %v88
    %v96 = vmul.f32 %v83, %v88
    %97 = vset.pattern.permute.xlu0 1
    %98 = vperm.xlu0 %97, %v35
    %v99 = vpop.permute.xlu0 %98
    %101 = vset.pattern.permute.xlu0 1
    %102 = vperm.xlu0 %101, %v36
    %v103 = vpop.permute.xlu0 %102
    %105 = vset.pattern.permute.xlu0 1
    %106 = vperm.xlu0 %105, %v37
    %v107 = vpop.permute.xlu0 %106
    %109 = vset.pattern.permute.xlu0 1
    %110 = vperm.xlu0 %109, %v38
    %v111 = vpop.permute.xlu0 %110
    %113 = vset.pattern.permute.xlu0 1
    %114 = vperm.xlu0 %113, %v39
    %v115 = vpop.permute.xlu0 %114
    %117 = vset.pattern.permute.xlu0 1
    %118 = vperm.xlu0 %117, %v40
    %v119 = vpop.permute.xlu0 %118
    %121 = vset.pattern.permute.xlu0 1
    %122 = vperm.xlu0 %121, %v41
    %v123 = vpop.permute.xlu0 %122
    %125 = vset.pattern.permute.xlu0 1
    %126 = vperm.xlu0 %125, %v42
    %v127 = vpop.permute.xlu0 %126
    %v129 = vlaneseq
    %v130 = vshrl.u32 %v129, 7
    %v131 = vsub.s32 1, %v130
    %v132 = vrot.slane %v43, %v131
    %v133 = vmul.f32 %v99, %v132
    %v134 = vmul.f32 %v103, %v132
    %v135 = vmul.f32 %v107, %v132
    %v136 = vmul.f32 %v111, %v132
    %v137 = vmul.f32 %v115, %v132
    %v138 = vmul.f32 %v119, %v132
    %v139 = vmul.f32 %v123, %v132
    %v140 = vmul.f32 %v127, %v132
    %v141 = vadd.f32 %v89, %v133
    %v142 = vadd.f32 %v90, %v134
    %v143 = vadd.f32 %v91, %v135
    %v144 = vadd.f32 %v92, %v136
    %v145 = vadd.f32 %v93, %v137
    %v146 = vadd.f32 %v94, %v138
    %v147 = vadd.f32 %v95, %v139
    %v148 = vadd.f32 %v96, %v140
    %v149 = vlaneseq
    %v150 = vshrl.u32 %v149, 7
    %v151 = vsub.s32 0, %v150
    %v152 = vrot.slane %v44, %v151
    %v153 = vadd.f32 %v141, %v152
    %v154 = vadd.f32 %v142, %v152
    %v155 = vadd.f32 %v143, %v152
    %v156 = vadd.f32 %v144, %v152
    %v157 = vadd.f32 %v145, %v152
    %v158 = vadd.f32 %v146, %v152
    %v159 = vadd.f32 %v147, %v152
    %v160 = vadd.f32 %v148, %v152
    %v161 = vmax.f32 %v153, 0.0
    %v162 = vmax.f32 %v154, 0.0
    %v163 = vmax.f32 %v155, 0.0
    %v164 = vmax.f32 %v156, 0.0
    %v165 = vmax.f32 %v157, 0.0
    %v166 = vmax.f32 %v158, 0.0
    %v167 = vmax.f32 %v159, 0.0
    %v168 = vmax.f32 %v160, 0.0
    %v169 = vpack.c.bf16 %v162, %v161
    %v170 = vpack.c.bf16 %v164, %v163
    %v171 = vpack.c.bf16 %v166, %v165
    %v172 = vpack.c.bf16 %v168, %v167
    %v173 = vld [vmem:[#allocation2] sm:$0xf]
    %v174 = vld [vmem:[#allocation2 + $0x4] sm:$0xf]
    %v175 = vld [vmem:[#allocation2 + $0x8] sm:$0xf]
    %v176 = vld [vmem:[#allocation2 + $0xc] sm:$0xf]
    %v177 = vld [vmem:[#allocation2 + $0x10] sm:$0xf]
    %v178 = vld [vmem:[#allocation2 + $0x14] sm:$0xf]
    %v179 = vld [vmem:[#allocation2 + $0x18] sm:$0xf]
    %v180 = vld [vmem:[#allocation2 + $0x1c] sm:$0xf]
    %v181 = vld [vmem:[#allocation2 + $0x20] sm:$0xf]
    %v182 = vld [vmem:[#allocation2 + $0x24] sm:$0xf]
    %v183 = vld [vmem:[#allocation2 + $0x28] sm:$0xf]
    %v184 = vld [vmem:[#allocation2 + $0x2c] sm:$0xf]
    %v185 = vld [vmem:[#allocation2 + $0x30] sm:$0xf]
    %v186 = vld [vmem:[#allocation2 + $0x34] sm:$0xf]
    %v187 = vld [vmem:[#allocation2 + $0x38] sm:$0xf]
    %v188 = vld [vmem:[#allocation2 + $0x3c] sm:$0xf]
    %v189 = vlaneseq
    %v190 = vshrl.u32 %v189, 7
    %v191 = vsub.s32 1, %v190
    %v192 = vrot.slane %v44, %v191
    %v209 = vunpack.c.l.b16 %v173
    %v210 = vunpack.c.l.b16 %v174
    %v211 = vunpack.c.l.b16 %v175
    %v212 = vunpack.c.l.b16 %v176
    %v213 = vunpack.c.l.b16 %v177
    %v214 = vunpack.c.l.b16 %v178
    %v215 = vunpack.c.l.b16 %v179
    %v216 = vunpack.c.l.b16 %v180
    %v217 = vunpack.c.l.b16 %v181
    %v218 = vunpack.c.l.b16 %v182
    %v219 = vunpack.c.l.b16 %v183
    %v220 = vunpack.c.l.b16 %v184
    %v221 = vunpack.c.l.b16 %v185
    %v222 = vunpack.c.l.b16 %v186
    %v223 = vunpack.c.l.b16 %v187
    %v224 = vunpack.c.l.b16 %v188
    %v225 = vpack.c.b16 %v210, %v209
    %v226 = vpack.c.b16 %v212, %v211
    %v227 = vpack.c.b16 %v214, %v213
    %v228 = vpack.c.b16 %v216, %v215
    %v229 = vpack.c.b16 %v218, %v217
    %v230 = vpack.c.b16 %v220, %v219
    %v231 = vpack.c.b16 %v222, %v221
    %v232 = vpack.c.b16 %v224, %v223
    %241 = vmatprep.subr.bf16.mxu0 0
    %242 = vmatpush1.bf16.msra.mxu0 %v225
    %243 = vmatprep.subr.bf16.mxu0 0
    %244 = vmatpush1.bf16.msra.mxu0 %v226
    %245 = vmatprep.subr.bf16.mxu0 0
    %246 = vmatpush1.bf16.msra.mxu0 %v227
    %247 = vmatprep.subr.bf16.mxu0 0
    %248 = vmatpush1.bf16.msra.mxu0 %v228
    %249 = vmatprep.subr.bf16.mxu0 0
    %250 = vmatpush1.bf16.msra.mxu0 %v229
    %251 = vmatprep.subr.bf16.mxu0 0
    %252 = vmatpush1.bf16.msra.mxu0 %v230
    %253 = vmatprep.subr.bf16.mxu0 0
    %254 = vmatpush1.bf16.msra.mxu0 %v231
    %255 = vmatprep.subr.bf16.mxu0 0
    %256 = vmatpush1.bf16.msra.mxu0 %v232
    %257 = vmatprep.subr.bf16.mxu0 0
    %258 = vmatpush1.bf16.msra.mxu0 0
    %259 = vmatprep.subr.bf16.mxu0 0
    %260 = vmatpush1.bf16.msra.mxu0 0
    %261 = vmatprep.subr.bf16.mxu0 0
    %262 = vmatpush1.bf16.msra.mxu0 0
    %263 = vmatprep.subr.bf16.mxu0 0
    %264 = vmatpush1.bf16.msra.mxu0 0
    %265 = vmatprep.subr.bf16.mxu0 0
    %266 = vmatpush1.bf16.msra.mxu0 0
    %267 = vmatprep.subr.bf16.mxu0 0
    %268 = vmatpush1.bf16.msra.mxu0 0
    %269 = vmatprep.subr.bf16.mxu0 0
    %270 = vmatpush1.bf16.msra.mxu0 0
    %271 = vmatprep.subr.bf16.mxu0 0
    %272 = vmatpush1.bf16.msra.mxu0 0
    %273 = vmatprep.mubr.bf16.mxu0 0
    %274 = vmatmul.mubr.bf16.gmra.mrb[0].mxu0 %v169
    %v275 = vpop.f32.mrb[0].mxu0
    %v276 = vadd.f32 %v192, %v275
    %v277 = vpop.f32.mrb[0].mxu0
    %v278 = vpop.f32.mrb[0].mxu0
    %v279 = vadd.f32 %v192, %v278
    %v280 = vpop.f32.mrb[0].mxu0
    %281 = vmatprep.mubr.bf16.mxu0 0
    %282 = vmatmul.mubr.bf16.gmra.mrb[0].mxu0 %v170
    %v283 = vpop.f32.mrb[0].mxu0
    %v284 = vadd.f32 %v192, %v283
    %v285 = vpop.f32.mrb[0].mxu0
    %v286 = vpop.f32.mrb[0].mxu0
    %v287 = vadd.f32 %v192, %v286
    %v288 = vpop.f32.mrb[0].mxu0
    %289 = vmatprep.mubr.bf16.mxu0 0
    %290 = vmatmul.mubr.bf16.gmra.mrb[0].mxu0 %v171
    %v291 = vpop.f32.mrb[0].mxu0
    %v292 = vadd.f32 %v192, %v291
    %v293 = vpop.f32.mrb[0].mxu0
    %v294 = vpop.f32.mrb[0].mxu0
    %v295 = vadd.f32 %v192, %v294
    %v296 = vpop.f32.mrb[0].mxu0
    %297 = vmatprep.mubr.bf16.mxu0 0
    %298 = vmatmul.mubr.bf16.gmra.mrb[0].mxu0 %v172
    %v299 = vpop.f32.mrb[0].mxu0
    %v300 = vadd.f32 %v192, %v299
    %v301 = vpop.f32.mrb[0].mxu0
    %v302 = vpop.f32.mrb[0].mxu0
    %v303 = vadd.f32 %v192, %v302
    %v304 = vpop.f32.mrb[0].mxu0
    %305 = vdwg.mxu0
    %v306 = vmax.f32 %v276, 0.0
    %v307 = vmax.f32 %v279, 0.0
    %v308 = vmax.f32 %v284, 0.0
    %v309 = vmax.f32 %v287, 0.0
    %v310 = vmax.f32 %v292, 0.0
    %v311 = vmax.f32 %v295, 0.0
    %v312 = vmax.f32 %v300, 0.0
    %v313 = vmax.f32 %v303, 0.0
    %v314 = vpack.c.bf16 %v307, %v306
    %v315 = vpack.c.bf16 %v309, %v308
    %v316 = vpack.c.bf16 %v311, %v310
    %v317 = vpack.c.bf16 %v313, %v312
    %s318 = scalar_lea.vmem [#allocation2], 64
    %v319 = vld [vmem:[%s318] sm:$0xf]
    %v320 = vld [vmem:[%s318 + $0x4] sm:$0xf]
    %v321 = vld [vmem:[%s318 + $0x8] sm:$0xf]
    %v322 = vld [vmem:[%s318 + $0xc] sm:$0xf]
    %v323 = vld [vmem:[%s318 + $0x10] sm:$0xf]
    %v324 = vld [vmem:[%s318 + $0x14] sm:$0xf]
    %v325 = vld [vmem:[%s318 + $0x18] sm:$0xf]
    %v326 = vld [vmem:[%s318 + $0x1c] sm:$0xf]
    %v327 = vld [vmem:[%s318 + $0x20] sm:$0xf]
    %v328 = vld [vmem:[%s318 + $0x24] sm:$0xf]
    %v329 = vld [vmem:[%s318 + $0x28] sm:$0xf]
    %v330 = vld [vmem:[%s318 + $0x2c] sm:$0xf]
    %v331 = vld [vmem:[%s318 + $0x30] sm:$0xf]
    %v332 = vld [vmem:[%s318 + $0x34] sm:$0xf]
    %v333 = vld [vmem:[%s318 + $0x38] sm:$0xf]
    %v334 = vld [vmem:[%s318 + $0x3c] sm:$0xf]
    %v335 = vlaneseq
    %v336 = vshrl.u32 %v335, 7
    %v337 = vsub.s32 2, %v336
    %v338 = vrot.slane %v44, %v337
    %v355 = vunpack.c.l.b16 %v319
    %v356 = vunpack.c.l.b16 %v320
    %v357 = vunpack.c.l.b16 %v321
    %v358 = vunpack.c.l.b16 %v322
    %v359 = vunpack.c.l.b16 %v323
    %v360 = vunpack.c.l.b16 %v324
    %v361 = vunpack.c.l.b16 %v325
    %v362 = vunpack.c.l.b16 %v326
    %v363 = vunpack.c.l.b16 %v327
    %v364 = vunpack.c.l.b16 %v328
    %v365 = vunpack.c.l.b16 %v329
    %v366 = vunpack.c.l.b16 %v330
    %v367 = vunpack.c.l.b16 %v331
    %v368 = vunpack.c.l.b16 %v332
    %v369 = vunpack.c.l.b16 %v333
    %v370 = vunpack.c.l.b16 %v334
    %v371 = vpack.c.b16 %v356, %v355
    %v372 = vpack.c.b16 %v358, %v357
    %v373 = vpack.c.b16 %v360, %v359
    %v374 = vpack.c.b16 %v362, %v361
    %v375 = vpack.c.b16 %v364, %v363
    %v376 = vpack.c.b16 %v366, %v365
    %v377 = vpack.c.b16 %v368, %v367
    %v378 = vpack.c.b16 %v370, %v369
    %387 = vmatprep.subr.bf16.mxu0 0
    %388 = vmatpush1.bf16.msra.mxu0 %v371
    %389 = vmatprep.subr.bf16.mxu0 0
    %390 = vmatpush1.bf16.msra.mxu0 %v372
    %391 = vmatprep.subr.bf16.mxu0 0
    %392 = vmatpush1.bf16.msra.mxu0 %v373
    %393 = vmatprep.subr.bf16.mxu0 0
    %394 = vmatpush1.bf16.msra.mxu0 %v374
    %395 = vmatprep.subr.bf16.mxu0 0
    %396 = vmatpush1.bf16.msra.mxu0 %v375
    %397 = vmatprep.subr.bf16.mxu0 0
    %398 = vmatpush1.bf16.msra.mxu0 %v376
    %399 = vmatprep.subr.bf16.mxu0 0
    %400 = vmatpush1.bf16.msra.mxu0 %v377
    %401 = vmatprep.subr.bf16.mxu0 0
    %402 = vmatpush1.bf16.msra.mxu0 %v378
    %403 = vmatprep.subr.bf16.mxu0 0
    %404 = vmatpush1.bf16.msra.mxu0 0
    %405 = vmatprep.subr.bf16.mxu0 0
    %406 = vmatpush1.bf16.msra.mxu0 0
    %407 = vmatprep.subr.bf16.mxu0 0
    %408 = vmatpush1.bf16.msra.mxu0 0
    %409 = vmatprep.subr.bf16.mxu0 0
    %410 = vmatpush1.bf16.msra.mxu0 0
    %411 = vmatprep.subr.bf16.mxu0 0
    %412 = vmatpush1.bf16.msra.mxu0 0
    %413 = vmatprep.subr.bf16.mxu0 0
    %414 = vmatpush1.bf16.msra.mxu0 0
    %415 = vmatprep.subr.bf16.mxu0 0
    %416 = vmatpush1.bf16.msra.mxu0 0
    %417 = vmatprep.subr.bf16.mxu0 0
    %418 = vmatpush1.bf16.msra.mxu0 0
    %419 = vmatprep.mubr.bf16.mxu0 0
    %420 = vmatmul.mubr.bf16.gmra.mrb[0].mxu0 %v314
    %v421 = vpop.f32.mrb[0].mxu0
    %v422 = vadd.f32 %v338, %v421
    %v423 = vpop.f32.mrb[0].mxu0
    %v424 = vpop.f32.mrb[0].mxu0
    %v425 = vadd.f32 %v338, %v424
    %v426 = vpop.f32.mrb[0].mxu0
    %427 = vmatprep.mubr.bf16.mxu0 0
    %428 = vmatmul.mubr.bf16.gmra.mrb[0].mxu0 %v315
    %v429 = vpop.f32.mrb[0].mxu0
    %v430 = vadd.f32 %v338, %v429
    %v431 = vpop.f32.mrb[0].mxu0
    %v432 = vpop.f32.mrb[0].mxu0
    %v433 = vadd.f32 %v338, %v432
    %v434 = vpop.f32.mrb[0].mxu0
    %435 = vmatprep.mubr.bf16.mxu0 0
    %436 = vmatmul.mubr.bf16.gmra.mrb[0].mxu0 %v316
    %v437 = vpop.f32.mrb[0].mxu0
    %v438 = vadd.f32 %v338, %v437
    %v439 = vpop.f32.mrb[0].mxu0
    %v440 = vpop.f32.mrb[0].mxu0
    %v441 = vadd.f32 %v338, %v440
    %v442 = vpop.f32.mrb[0].mxu0
    %443 = vmatprep.mubr.bf16.mxu0 0
    %444 = vmatmul.mubr.bf16.gmra.mrb[0].mxu0 %v317
    %v445 = vpop.f32.mrb[0].mxu0
    %v446 = vadd.f32 %v338, %v445
    %v447 = vpop.f32.mrb[0].mxu0
    %v448 = vpop.f32.mrb[0].mxu0
    %v449 = vadd.f32 %v338, %v448
    %v450 = vpop.f32.mrb[0].mxu0
    %451 = vdwg.mxu0
    %v452 = vmax.f32 %v422, 0.0
    %v453 = vmax.f32 %v425, 0.0
    %v454 = vmax.f32 %v430, 0.0
    %v455 = vmax.f32 %v433, 0.0
    %v456 = vmax.f32 %v438, 0.0
    %v457 = vmax.f32 %v441, 0.0
    %v458 = vmax.f32 %v446, 0.0
    %v459 = vmax.f32 %v449, 0.0
    %v460 = vpack.c.bf16 %v453, %v452
    %v461 = vpack.c.bf16 %v455, %v454
    %v462 = vpack.c.bf16 %v457, %v456
    %v463 = vpack.c.bf16 %v459, %v458
    %s464 = scalar_lea.vmem [#allocation2], 128
    %v465 = vld [vmem:[%s464] sm:$0xf]
    %v466 = vld [vmem:[%s464 + $0x4] sm:$0xf]
    %v467 = vld [vmem:[%s464 + $0x8] sm:$0xf]
    %v468 = vld [vmem:[%s464 + $0xc] sm:$0xf]
    %v469 = vld [vmem:[%s464 + $0x10] sm:$0xf]
    %v470 = vld [vmem:[%s464 + $0x14] sm:$0xf]
    %v471 = vld [vmem:[%s464 + $0x18] sm:$0xf]
    %v472 = vld [vmem:[%s464 + $0x1c] sm:$0xf]
    %v473 = vld [vmem:[%s464 + $0x20] sm:$0xf]
    %v474 = vld [vmem:[%s464 + $0x24] sm:$0xf]
    %v475 = vld [vmem:[%s464 + $0x28] sm:$0xf]
    %v476 = vld [vmem:[%s464 + $0x2c] sm:$0xf]
    %v477 = vld [vmem:[%s464 + $0x30] sm:$0xf]
    %v478 = vld [vmem:[%s464 + $0x34] sm:$0xf]
    %v479 = vld [vmem:[%s464 + $0x38] sm:$0xf]
    %v480 = vld [vmem:[%s464 + $0x3c] sm:$0xf]
    %v481 = vlaneseq
    %v482 = vshrl.u32 %v481, 7
    %v483 = vsub.s32 3, %v482
    %v484 = vrot.slane %v44, %v483
    %v501 = vunpack.c.l.b16 %v465
    %v502 = vunpack.c.l.b16 %v466
    %v503 = vunpack.c.l.b16 %v467
    %v504 = vunpack.c.l.b16 %v468
    %v505 = vunpack.c.l.b16 %v469
    %v506 = vunpack.c.l.b16 %v470
    %v507 = vunpack.c.l.b16 %v471
    %v508 = vunpack.c.l.b16 %v472
    %v509 = vunpack.c.l.b16 %v473
    %v510 = vunpack.c.l.b16 %v474
    %v511 = vunpack.c.l.b16 %v475
    %v512 = vunpack.c.l.b16 %v476
    %v513 = vunpack.c.l.b16 %v477
    %v514 = vunpack.c.l.b16 %v478
    %v515 = vunpack.c.l.b16 %v479
    %v516 = vunpack.c.l.b16 %v480
    %v517 = vpack.c.b16 %v502, %v501
    %v518 = vpack.c.b16 %v504, %v503
    %v519 = vpack.c.b16 %v506, %v505
    %v520 = vpack.c.b16 %v508, %v507
    %v521 = vpack.c.b16 %v510, %v509
    %v522 = vpack.c.b16 %v512, %v511
    %v523 = vpack.c.b16 %v514, %v513
    %v524 = vpack.c.b16 %v516, %v515
    %533 = vmatprep.subr.bf16.mxu0 0
    %534 = vmatpush1.bf16.msra.mxu0 %v517
    %535 = vmatprep.subr.bf16.mxu0 0
    %536 = vmatpush1.bf16.msra.mxu0 %v518
    %537 = vmatprep.subr.bf16.mxu0 0
    %538 = vmatpush1.bf16.msra.mxu0 %v519
    %539 = vmatprep.subr.bf16.mxu0 0
    %540 = vmatpush1.bf16.msra.mxu0 %v520
    %541 = vmatprep.subr.bf16.mxu0 0
    %542 = vmatpush1.bf16.msra.mxu0 %v521
    %543 = vmatprep.subr.bf16.mxu0 0
    %544 = vmatpush1.bf16.msra.mxu0 %v522
    %545 = vmatprep.subr.bf16.mxu0 0
    %546 = vmatpush1.bf16.msra.mxu0 %v523
    %547 = vmatprep.subr.bf16.mxu0 0
    %548 = vmatpush1.bf16.msra.mxu0 %v524
    %549 = vmatprep.subr.bf16.mxu0 0
    %550 = vmatpush1.bf16.msra.mxu0 0
    %551 = vmatprep.subr.bf16.mxu0 0
    %552 = vmatpush1.bf16.msra.mxu0 0
    %553 = vmatprep.subr.bf16.mxu0 0
    %554 = vmatpush1.bf16.msra.mxu0 0
    %555 = vmatprep.subr.bf16.mxu0 0
    %556 = vmatpush1.bf16.msra.mxu0 0
    %557 = vmatprep.subr.bf16.mxu0 0
    %558 = vmatpush1.bf16.msra.mxu0 0
    %559 = vmatprep.subr.bf16.mxu0 0
    %560 = vmatpush1.bf16.msra.mxu0 0
    %561 = vmatprep.subr.bf16.mxu0 0
    %562 = vmatpush1.bf16.msra.mxu0 0
    %563 = vmatprep.subr.bf16.mxu0 0
    %564 = vmatpush1.bf16.msra.mxu0 0
    %565 = vmatprep.mubr.bf16.mxu0 0
    %566 = vmatmul.mubr.bf16.gmra.mrb[0].mxu0 %v460
    %v567 = vpop.f32.mrb[0].mxu0
    %v568 = vadd.f32 %v484, %v567
    %v569 = vpop.f32.mrb[0].mxu0
    %v570 = vpop.f32.mrb[0].mxu0
    %v571 = vadd.f32 %v484, %v570
    %v572 = vpop.f32.mrb[0].mxu0
    %573 = vmatprep.mubr.bf16.mxu0 0
    %574 = vmatmul.mubr.bf16.gmra.mrb[0].mxu0 %v461
    %v575 = vpop.f32.mrb[0].mxu0
    %v576 = vadd.f32 %v484, %v575
    %v577 = vpop.f32.mrb[0].mxu0
    %v578 = vpop.f32.mrb[0].mxu0
    %v579 = vadd.f32 %v484, %v578
    %v580 = vpop.f32.mrb[0].mxu0
    %581 = vmatprep.mubr.bf16.mxu0 0
    %582 = vmatmul.mubr.bf16.gmra.mrb[0].mxu0 %v462
    %v583 = vpop.f32.mrb[0].mxu0
    %v584 = vadd.f32 %v484, %v583
    %v585 = vpop.f32.mrb[0].mxu0
    %v586 = vpop.f32.mrb[0].mxu0
    %v587 = vadd.f32 %v484, %v586
    %v588 = vpop.f32.mrb[0].mxu0
    %589 = vmatprep.mubr.bf16.mxu0 0
    %590 = vmatmul.mubr.bf16.gmra.mrb[0].mxu0 %v463
    %v591 = vpop.f32.mrb[0].mxu0
    %v592 = vadd.f32 %v484, %v591
    %v593 = vpop.f32.mrb[0].mxu0
    %v594 = vpop.f32.mrb[0].mxu0
    %v595 = vadd.f32 %v484, %v594
    %v596 = vpop.f32.mrb[0].mxu0
    %597 = vdwg.mxu0
    %v598 = vmax.f32 %v568, 0.0
    %v599 = vmax.f32 %v571, 0.0
    %v600 = vmax.f32 %v576, 0.0
    %v601 = vmax.f32 %v579, 0.0
    %v602 = vmax.f32 %v584, 0.0
    %v603 = vmax.f32 %v587, 0.0
    %v604 = vmax.f32 %v592, 0.0
    %v605 = vmax.f32 %v595, 0.0
    %v606 = vpack.c.bf16 %v599, %v598
    %v607 = vpack.c.bf16 %v601, %v600
    %v608 = vpack.c.bf16 %v603, %v602
    %v609 = vpack.c.bf16 %v605, %v604
    %s610 = scalar_lea.vmem [#allocation2], 192
    %v611 = vld [vmem:[%s610] sm:$0xf]
    %v612 = vld [vmem:[%s610 + $0x4] sm:$0xf]
    %v613 = vld [vmem:[%s610 + $0x8] sm:$0xf]
    %v614 = vld [vmem:[%s610 + $0xc] sm:$0xf]
    %v615 = vld [vmem:[%s610 + $0x10] sm:$0xf]
    %v616 = vld [vmem:[%s610 + $0x14] sm:$0xf]
    %v617 = vld [vmem:[%s610 + $0x18] sm:$0xf]
    %v618 = vld [vmem:[%s610 + $0x1c] sm:$0xf]
    %v619 = vld [vmem:[%s610 + $0x20] sm:$0xf]
    %v620 = vld [vmem:[%s610 + $0x24] sm:$0xf]
    %v621 = vld [vmem:[%s610 + $0x28] sm:$0xf]
    %v622 = vld [vmem:[%s610 + $0x2c] sm:$0xf]
    %v623 = vld [vmem:[%s610 + $0x30] sm:$0xf]
    %v624 = vld [vmem:[%s610 + $0x34] sm:$0xf]
    %v625 = vld [vmem:[%s610 + $0x38] sm:$0xf]
    %v626 = vld [vmem:[%s610 + $0x3c] sm:$0xf]
    %v627 = vlaneseq
    %v628 = vshrl.u32 %v627, 7
    %v629 = vsub.s32 4, %v628
    %v630 = vrot.slane %v44, %v629
    %v647 = vunpack.c.l.b16 %v611
    %v648 = vunpack.c.l.b16 %v612
    %v649 = vunpack.c.l.b16 %v613
    %v650 = vunpack.c.l.b16 %v614
    %v651 = vunpack.c.l.b16 %v615
    %v652 = vunpack.c.l.b16 %v616
    %v653 = vunpack.c.l.b16 %v617
    %v654 = vunpack.c.l.b16 %v618
    %v655 = vunpack.c.l.b16 %v619
    %v656 = vunpack.c.l.b16 %v620
    %v657 = vunpack.c.l.b16 %v621
    %v658 = vunpack.c.l.b16 %v622
    %v659 = vunpack.c.l.b16 %v623
    %v660 = vunpack.c.l.b16 %v624
    %v661 = vunpack.c.l.b16 %v625
    %v662 = vunpack.c.l.b16 %v626
    %v663 = vpack.c.b16 %v648, %v647
    %v664 = vpack.c.b16 %v650, %v649
    %v665 = vpack.c.b16 %v652, %v651
    %v666 = vpack.c.b16 %v654, %v653
    %v667 = vpack.c.b16 %v656, %v655
    %v668 = vpack.c.b16 %v658, %v657
    %v669 = vpack.c.b16 %v660, %v659
    %v670 = vpack.c.b16 %v662, %v661
    %679 = vmatprep.subr.bf16.mxu0 0
    %680 = vmatpush1.bf16.msra.mxu0 %v663
    %681 = vmatprep.subr.bf16.mxu0 0
    %682 = vmatpush1.bf16.msra.mxu0 %v664
    %683 = vmatprep.subr.bf16.mxu0 0
    %684 = vmatpush1.bf16.msra.mxu0 %v665
    %685 = vmatprep.subr.bf16.mxu0 0
    %686 = vmatpush1.bf16.msra.mxu0 %v666
    %687 = vmatprep.subr.bf16.mxu0 0
    %688 = vmatpush1.bf16.msra.mxu0 %v667
    %689 = vmatprep.subr.bf16.mxu0 0
    %690 = vmatpush1.bf16.msra.mxu0 %v668
    %691 = vmatprep.subr.bf16.mxu0 0
    %692 = vmatpush1.bf16.msra.mxu0 %v669
    %693 = vmatprep.subr.bf16.mxu0 0
    %694 = vmatpush1.bf16.msra.mxu0 %v670
    %695 = vmatprep.subr.bf16.mxu0 0
    %696 = vmatpush1.bf16.msra.mxu0 0
    %697 = vmatprep.subr.bf16.mxu0 0
    %698 = vmatpush1.bf16.msra.mxu0 0
    %699 = vmatprep.subr.bf16.mxu0 0
    %700 = vmatpush1.bf16.msra.mxu0 0
    %701 = vmatprep.subr.bf16.mxu0 0
    %702 = vmatpush1.bf16.msra.mxu0 0
    %703 = vmatprep.subr.bf16.mxu0 0
    %704 = vmatpush1.bf16.msra.mxu0 0
    %705 = vmatprep.subr.bf16.mxu0 0
    %706 = vmatpush1.bf16.msra.mxu0 0
    %707 = vmatprep.subr.bf16.mxu0 0
    %708 = vmatpush1.bf16.msra.mxu0 0
    %709 = vmatprep.subr.bf16.mxu0 0
    %710 = vmatpush1.bf16.msra.mxu0 0
    %711 = vmatprep.mubr.bf16.mxu0 0
    %712 = vmatmul.mubr.bf16.gmra.mrb[0].mxu0 %v606
    %v713 = vpop.f32.mrb[0].mxu0
    %v714 = vadd.f32 %v630, %v713
    %v715 = vpop.f32.mrb[0].mxu0
    %v716 = vpop.f32.mrb[0].mxu0
    %v717 = vadd.f32 %v630, %v716
    %v718 = vpop.f32.mrb[0].mxu0
    %719 = vmatprep.mubr.bf16.mxu0 0
    %720 = vmatmul.mubr.bf16.gmra.mrb[0].mxu0 %v607
    %v721 = vpop.f32.mrb[0].mxu0
    %v722 = vadd.f32 %v630, %v721
    %v723 = vpop.f32.mrb[0].mxu0
    %v724 = vpop.f32.mrb[0].mxu0
    %v725 = vadd.f32 %v630, %v724
    %v726 = vpop.f32.mrb[0].mxu0
    %727 = vmatprep.mubr.bf16.mxu0 0
    %728 = vmatmul.mubr.bf16.gmra.mrb[0].mxu0 %v608
    %v729 = vpop.f32.mrb[0].mxu0
    %v730 = vadd.f32 %v630, %v729
    %v731 = vpop.f32.mrb[0].mxu0
    %v732 = vpop.f32.mrb[0].mxu0
    %v733 = vadd.f32 %v630, %v732
    %v734 = vpop.f32.mrb[0].mxu0
    %735 = vmatprep.mubr.bf16.mxu0 0
    %736 = vmatmul.mubr.bf16.gmra.mrb[0].mxu0 %v609
    %v737 = vpop.f32.mrb[0].mxu0
    %v738 = vadd.f32 %v630, %v737
    %v739 = vpop.f32.mrb[0].mxu0
    %v740 = vpop.f32.mrb[0].mxu0
    %v741 = vadd.f32 %v630, %v740
    %v742 = vpop.f32.mrb[0].mxu0
    %743 = vdwg.mxu0
    %v744 = vmax.f32 %v714, 0.0
    %v745 = vmax.f32 %v717, 0.0
    %v746 = vmax.f32 %v722, 0.0
    %v747 = vmax.f32 %v725, 0.0
    %v748 = vmax.f32 %v730, 0.0
    %v749 = vmax.f32 %v733, 0.0
    %v750 = vmax.f32 %v738, 0.0
    %v751 = vmax.f32 %v741, 0.0
    %v752 = vpack.c.bf16 %v745, %v744
    %v753 = vpack.c.bf16 %v747, %v746
    %v754 = vpack.c.bf16 %v749, %v748
    %v755 = vpack.c.bf16 %v751, %v750
    %s756 = scalar_lea.vmem [#allocation2], 256
    %v757 = vld [vmem:[%s756] sm:$0xf]
    %v758 = vld [vmem:[%s756 + $0x4] sm:$0xf]
    %v759 = vld [vmem:[%s756 + $0x8] sm:$0xf]
    %v760 = vld [vmem:[%s756 + $0xc] sm:$0xf]
    %v761 = vld [vmem:[%s756 + $0x10] sm:$0xf]
    %v762 = vld [vmem:[%s756 + $0x14] sm:$0xf]
    %v763 = vld [vmem:[%s756 + $0x18] sm:$0xf]
    %v764 = vld [vmem:[%s756 + $0x1c] sm:$0xf]
    %v765 = vld [vmem:[%s756 + $0x20] sm:$0xf]
    %v766 = vld [vmem:[%s756 + $0x24] sm:$0xf]
    %v767 = vld [vmem:[%s756 + $0x28] sm:$0xf]
    %v768 = vld [vmem:[%s756 + $0x2c] sm:$0xf]
    %v769 = vld [vmem:[%s756 + $0x30] sm:$0xf]
    %v770 = vld [vmem:[%s756 + $0x34] sm:$0xf]
    %v771 = vld [vmem:[%s756 + $0x38] sm:$0xf]
    %v772 = vld [vmem:[%s756 + $0x3c] sm:$0xf]
    %v773 = vlaneseq
    %v774 = vshrl.u32 %v773, 7
    %v775 = vsub.s32 5, %v774
    %v776 = vrot.slane %v44, %v775
    %v793 = vunpack.c.l.b16 %v757
    %v794 = vunpack.c.l.b16 %v758
    %v795 = vunpack.c.l.b16 %v759
    %v796 = vunpack.c.l.b16 %v760
    %v797 = vunpack.c.l.b16 %v761
    %v798 = vunpack.c.l.b16 %v762
    %v799 = vunpack.c.l.b16 %v763
    %v800 = vunpack.c.l.b16 %v764
    %v801 = vunpack.c.l.b16 %v765
    %v802 = vunpack.c.l.b16 %v766
    %v803 = vunpack.c.l.b16 %v767
    %v804 = vunpack.c.l.b16 %v768
    %v805 = vunpack.c.l.b16 %v769
    %v806 = vunpack.c.l.b16 %v770
    %v807 = vunpack.c.l.b16 %v771
    %v808 = vunpack.c.l.b16 %v772
    %v809 = vpack.c.b16 %v794, %v793
    %v810 = vpack.c.b16 %v796, %v795
    %v811 = vpack.c.b16 %v798, %v797
    %v812 = vpack.c.b16 %v800, %v799
    %v813 = vpack.c.b16 %v802, %v801
    %v814 = vpack.c.b16 %v804, %v803
    %v815 = vpack.c.b16 %v806, %v805
    %v816 = vpack.c.b16 %v808, %v807
    %825 = vmatprep.subr.bf16.mxu0 0
    %826 = vmatpush1.bf16.msra.mxu0 %v809
    %827 = vmatprep.subr.bf16.mxu0 0
    %828 = vmatpush1.bf16.msra.mxu0 %v810
    %829 = vmatprep.subr.bf16.mxu0 0
    %830 = vmatpush1.bf16.msra.mxu0 %v811
    %831 = vmatprep.subr.bf16.mxu0 0
    %832 = vmatpush1.bf16.msra.mxu0 %v812
    %833 = vmatprep.subr.bf16.mxu0 0
    %834 = vmatpush1.bf16.msra.mxu0 %v813
    %835 = vmatprep.subr.bf16.mxu0 0
    %836 = vmatpush1.bf16.msra.mxu0 %v814
    %837 = vmatprep.subr.bf16.mxu0 0
    %838 = vmatpush1.bf16.msra.mxu0 %v815
    %839 = vmatprep.subr.bf16.mxu0 0
    %840 = vmatpush1.bf16.msra.mxu0 %v816
    %841 = vmatprep.subr.bf16.mxu0 0
    %842 = vmatpush1.bf16.msra.mxu0 0
    %843 = vmatprep.subr.bf16.mxu0 0
    %844 = vmatpush1.bf16.msra.mxu0 0
    %845 = vmatprep.subr.bf16.mxu0 0
    %846 = vmatpush1.bf16.msra.mxu0 0
    %847 = vmatprep.subr.bf16.mxu0 0
    %848 = vmatpush1.bf16.msra.mxu0 0
    %849 = vmatprep.subr.bf16.mxu0 0
    %850 = vmatpush1.bf16.msra.mxu0 0
    %851 = vmatprep.subr.bf16.mxu0 0
    %852 = vmatpush1.bf16.msra.mxu0 0
    %853 = vmatprep.subr.bf16.mxu0 0
    %854 = vmatpush1.bf16.msra.mxu0 0
    %855 = vmatprep.subr.bf16.mxu0 0
    %856 = vmatpush1.bf16.msra.mxu0 0
    %857 = vmatprep.mubr.bf16.mxu0 0
    %858 = vmatmul.mubr.bf16.gmra.mrb[0].mxu0 %v752
    %v859 = vpop.f32.mrb[0].mxu0
    %v860 = vadd.f32 %v776, %v859
    %v861 = vpop.f32.mrb[0].mxu0
    %v862 = vpop.f32.mrb[0].mxu0
    %v863 = vadd.f32 %v776, %v862
    %v864 = vpop.f32.mrb[0].mxu0
    %865 = vmatprep.mubr.bf16.mxu0 0
    %866 = vmatmul.mubr.bf16.gmra.mrb[0].mxu0 %v753
    %v867 = vpop.f32.mrb[0].mxu0
    %v868 = vadd.f32 %v776, %v867
    %v869 = vpop.f32.mrb[0].mxu0
    %v870 = vpop.f32.mrb[0].mxu0
    %v871 = vadd.f32 %v776, %v870
    %v872 = vpop.f32.mrb[0].mxu0
    %873 = vmatprep.mubr.bf16.mxu0 0
    %874 = vmatmul.mubr.bf16.gmra.mrb[0].mxu0 %v754
    %v875 = vpop.f32.mrb[0].mxu0
    %v876 = vadd.f32 %v776, %v875
    %v877 = vpop.f32.mrb[0].mxu0
    %v878 = vpop.f32.mrb[0].mxu0
    %v879 = vadd.f32 %v776, %v878
    %v880 = vpop.f32.mrb[0].mxu0
    %881 = vmatprep.mubr.bf16.mxu0 0
    %882 = vmatmul.mubr.bf16.gmra.mrb[0].mxu0 %v755
    %v883 = vpop.f32.mrb[0].mxu0
    %v884 = vadd.f32 %v776, %v883
    %v885 = vpop.f32.mrb[0].mxu0
    %v886 = vpop.f32.mrb[0].mxu0
    %v887 = vadd.f32 %v776, %v886
    %v888 = vpop.f32.mrb[0].mxu0
    %889 = vdwg.mxu0
    %v890 = vmax.f32 %v860, 0.0
    %v891 = vmax.f32 %v863, 0.0
    %v892 = vmax.f32 %v868, 0.0
    %v893 = vmax.f32 %v871, 0.0
    %v894 = vmax.f32 %v876, 0.0
    %v895 = vmax.f32 %v879, 0.0
    %v896 = vmax.f32 %v884, 0.0
    %v897 = vmax.f32 %v887, 0.0
    %v898 = vpack.c.bf16 %v891, %v890
    %v899 = vpack.c.bf16 %v893, %v892
    %v900 = vpack.c.bf16 %v895, %v894
    %v901 = vpack.c.bf16 %v897, %v896
    %v902 = vld [vmem:[%s3] sm:$0xf]
    %v903 = vld [vmem:[%s3 + $0x4] sm:$0xf]
    %v904 = vld [vmem:[%s3 + $0x8] sm:$0xf]
    %v905 = vld [vmem:[%s3 + $0xc] sm:$0xf]
    %v906 = vld [vmem:[%s3 + $0x10] sm:$0xf]
    %v907 = vld [vmem:[%s3 + $0x14] sm:$0xf]
    %v908 = vld [vmem:[%s3 + $0x18] sm:$0xf]
    %v909 = vld [vmem:[%s3 + $0x1c] sm:$0xf]
    %v910 = vld [vmem:[%s3 + $0x20] sm:$0xf]
    %v911 = vld [vmem:[%s3 + $0x24] sm:$0xf]
    %v912 = vld [vmem:[%s3 + $0x28] sm:$0xf]
    %v913 = vld [vmem:[%s3 + $0x2c] sm:$0xf]
    %v914 = vld [vmem:[%s3 + $0x30] sm:$0xf]
    %v915 = vld [vmem:[%s3 + $0x34] sm:$0xf]
    %v916 = vld [vmem:[%s3 + $0x38] sm:$0xf]
    %v917 = vld [vmem:[%s3 + $0x3c] sm:$0xf]
    %v918 = vlaneseq
    %v919 = vshrl.u32 %v918, 7
    %v920 = vsub.s32 6, %v919
    %v921 = vrot.slane %v44, %v920
    %v938 = vunpack.c.l.b16 %v902
    %v939 = vunpack.c.l.b16 %v903
    %v940 = vunpack.c.l.b16 %v904
    %v941 = vunpack.c.l.b16 %v905
    %v942 = vunpack.c.l.b16 %v906
    %v943 = vunpack.c.l.b16 %v907
    %v944 = vunpack.c.l.b16 %v908
    %v945 = vunpack.c.l.b16 %v909
    %v946 = vunpack.c.l.b16 %v910
    %v947 = vunpack.c.l.b16 %v911
    %v948 = vunpack.c.l.b16 %v912
    %v949 = vunpack.c.l.b16 %v913
    %v950 = vunpack.c.l.b16 %v914
    %v951 = vunpack.c.l.b16 %v915
    %v952 = vunpack.c.l.b16 %v916
    %v953 = vunpack.c.l.b16 %v917
    %v954 = vpack.c.b16 %v939, %v938
    %v955 = vpack.c.b16 %v941, %v940
    %v956 = vpack.c.b16 %v943, %v942
    %v957 = vpack.c.b16 %v945, %v944
    %v958 = vpack.c.b16 %v947, %v946
    %v959 = vpack.c.b16 %v949, %v948
    %v960 = vpack.c.b16 %v951, %v950
    %v961 = vpack.c.b16 %v953, %v952
    %970 = vmatprep.subr.bf16.mxu0 0
    %971 = vmatpush1.bf16.msra.mxu0 %v954
    %972 = vmatprep.subr.bf16.mxu0 0
    %973 = vmatpush1.bf16.msra.mxu0 %v955
    %974 = vmatprep.subr.bf16.mxu0 0
    %975 = vmatpush1.bf16.msra.mxu0 %v956
    %976 = vmatprep.subr.bf16.mxu0 0
    %977 = vmatpush1.bf16.msra.mxu0 %v957
    %978 = vmatprep.subr.bf16.mxu0 0
    %979 = vmatpush1.bf16.msra.mxu0 %v958
    %980 = vmatprep.subr.bf16.mxu0 0
    %981 = vmatpush1.bf16.msra.mxu0 %v959
    %982 = vmatprep.subr.bf16.mxu0 0
    %983 = vmatpush1.bf16.msra.mxu0 %v960
    %984 = vmatprep.subr.bf16.mxu0 0
    %985 = vmatpush1.bf16.msra.mxu0 %v961
    %986 = vmatprep.subr.bf16.mxu0 0
    %987 = vmatpush1.bf16.msra.mxu0 0
    %988 = vmatprep.subr.bf16.mxu0 0
    %989 = vmatpush1.bf16.msra.mxu0 0
    %990 = vmatprep.subr.bf16.mxu0 0
    %991 = vmatpush1.bf16.msra.mxu0 0
    %992 = vmatprep.subr.bf16.mxu0 0
    %993 = vmatpush1.bf16.msra.mxu0 0
    %994 = vmatprep.subr.bf16.mxu0 0
    %995 = vmatpush1.bf16.msra.mxu0 0
    %996 = vmatprep.subr.bf16.mxu0 0
    %997 = vmatpush1.bf16.msra.mxu0 0
    %998 = vmatprep.subr.bf16.mxu0 0
    %999 = vmatpush1.bf16.msra.mxu0 0
    %1000 = vmatprep.subr.bf16.mxu0 0
    %1001 = vmatpush1.bf16.msra.mxu0 0
    %1002 = vmatprep.mubr.bf16.mxu0 0
    %1003 = vmatmul.mubr.bf16.gmra.mrb[0].mxu0 %v898
    %v1004 = vpop.f32.mrb[0].mxu0
    %v1005 = vadd.f32 %v921, %v1004
    %v1006 = vpop.f32.mrb[0].mxu0
    %v1007 = vpop.f32.mrb[0].mxu0
    %v1008 = vadd.f32 %v921, %v1007
    %v1009 = vpop.f32.mrb[0].mxu0
    %1010 = vmatprep.mubr.bf16.mxu0 0
    %1011 = vmatmul.mubr.bf16.gmra.mrb[0].mxu0 %v899
    %v1012 = vpop.f32.mrb[0].mxu0
    %v1013 = vadd.f32 %v921, %v1012
    %v1014 = vpop.f32.mrb[0].mxu0
    %v1015 = vpop.f32.mrb[0].mxu0
    %v1016 = vadd.f32 %v921, %v1015
    %v1017 = vpop.f32.mrb[0].mxu0
    %1018 = vmatprep.mubr.bf16.mxu0 0
    %1019 = vmatmul.mubr.bf16.gmra.mrb[0].mxu0 %v900
    %v1020 = vpop.f32.mrb[0].mxu0
    %v1021 = vadd.f32 %v921, %v1020
    %v1022 = vpop.f32.mrb[0].mxu0
    %v1023 = vpop.f32.mrb[0].mxu0
    %v1024 = vadd.f32 %v921, %v1023
    %v1025 = vpop.f32.mrb[0].mxu0
    %1026 = vmatprep.mubr.bf16.mxu0 0
    %1027 = vmatmul.mubr.bf16.gmra.mrb[0].mxu0 %v901
    %v1028 = vpop.f32.mrb[0].mxu0
    %v1029 = vadd.f32 %v921, %v1028
    %v1030 = vpop.f32.mrb[0].mxu0
    %v1031 = vpop.f32.mrb[0].mxu0
    %v1032 = vadd.f32 %v921, %v1031
    %v1033 = vpop.f32.mrb[0].mxu0
    %1034 = vdwg.mxu0
    %1035 = vst [vmem:[%s5] sm:$0xff] %v1005
    %1036 = vst [vmem:[%s5 + $0x8] sm:$0xff] %v1008
    %1037 = vst [vmem:[%s5 + $0x10] sm:$0xff] %v1013
    %1038 = vst [vmem:[%s5 + $0x18] sm:$0xff] %v1016
    %1039 = vst [vmem:[%s5 + $0x20] sm:$0xff] %v1021
    %1040 = vst [vmem:[%s5 + $0x28] sm:$0xff] %v1024
    %1041 = vst [vmem:[%s5 + $0x30] sm:$0xff] %v1029
    %1042 = vst [vmem:[%s5 + $0x38] sm:$0xff] %v1032
    // Predicated region
    $region26: #{hw2model_forward.1} parent=1 // pred_check
      _
    $region27: #{hw2model_forward.1} parent=1 // pred_check_branch
      %1044 = sbr.rel (0) target = $region29
    $region28: #{hw2model_forward.1} parent=1 // pred_region
      _
    $region29: #{hw2model_forward.1} parent=1 // pred_fallthru
      _
    // Predicated region
    $region30: #{hw2model_forward.1} parent=1 // pred_check
      _
    $region31: #{hw2model_forward.1} parent=1 // pred_check_branch
      %1046 = sbr.rel (0) target = $region33
    $region32: #{hw2model_forward.1} parent=1 // pred_region
      _
    $region33: #{hw2model_forward.1} parent=1 // pred_fallthru
      _
    %1047 = vsyncpa [#allocation3], 1

</llo_original>
